<compile_context>
chip_gen: v6e
topology: v6e:2x2x1
jax: 0.10.0
libtpu: 0.0.40
codegen_flags: <defaults>
</compile_context>

<pallas_src>
import functools

import jax
import jax.numpy as jnp
from jax.experimental import pallas as pl
from jax.experimental.pallas import tpu as pltpu

INPUT_SIZE = 7        # columns: F, T1, CA1, F1, Fc1, Tc1, Time
HIDDEN_NODES = 128
HIDDEN_LAYERS = 3
OUTPUT_SIZE = 4

K_PAD = 8             # layer-1 contraction padded 7 -> 8 (sublane aligned)
N_PAD = 128           # output features padded 4 -> 128 (lane-dense stores)


def _round_up(n, m):
    return ((n + m - 1) // m) * m


def _pinn_mlp_kernel(x_ref,
                     w1_ref, b1_ref,
                     w2_ref, b2_ref,
                     w3_ref, b3_ref,
                     w4_ref, b4_ref,
                     o_ref):
    # x tile: [TILE_B, K_PAD] f32; weights are bf16, biases f32.
    x = x_ref[...].astype(jnp.bfloat16)

    # Layer 1: Linear(7->128) + Tanh   (Dropout == identity in eval mode)
    h = jnp.dot(x, w1_ref[...], preferred_element_type=jnp.float32)
    h = jnp.tanh(h + b1_ref[...])                               # [TB, 128] f32

    # Layer 2: Linear(128->128) + Tanh
    h = jnp.dot(h.astype(jnp.bfloat16), w2_ref[...],
                preferred_element_type=jnp.float32)
    h = jnp.tanh(h + b2_ref[...])

    # Layer 3: Linear(128->128) + Tanh
    h = jnp.dot(h.astype(jnp.bfloat16), w3_ref[...],
                preferred_element_type=jnp.float32)
    h = jnp.tanh(h + b3_ref[...])

    # Output layer: Linear(128->4), padded to 128 lanes, no activation.
    out = jnp.dot(h.astype(jnp.bfloat16), w4_ref[...],
                  preferred_element_type=jnp.float32)
    o_ref[...] = (out + b4_ref[...]).astype(o_ref.dtype)        # [TB, 128]


def _resident(shape):
    """Full-array BlockSpec with a constant index_map -> VMEM-resident."""
    return pl.BlockSpec(shape, lambda i: (0, 0))


def prepare_params(params):
    """One-time padding + bf16 casts (keep out of the per-call hot path).

    params: (w1, b1, w2, b2, w3, b3, w4, b4) with weights stored [in, out]
    (transposed vs PyTorch) so the kernel computes x @ W + b.
    """
    w1, b1, w2, b2, w3, b3, w4, b4 = params
    w1_p = jnp.pad(w1, ((0, K_PAD - INPUT_SIZE), (0, 0))).astype(jnp.bfloat16)
    w2_b = w2.astype(jnp.bfloat16)
    w3_b = w3.astype(jnp.bfloat16)
    w4_p = jnp.pad(w4, ((0, 0), (0, N_PAD - OUTPUT_SIZE))).astype(jnp.bfloat16)
    b4_p = jnp.pad(b4, ((0, 0), (0, N_PAD - OUTPUT_SIZE)))
    return (w1_p, b1, w2_b, b2, w3_b, b3, w4_p, b4_p)


@functools.partial(jax.jit, static_argnames=("tile_b",))
def pinn_forward(x, prepared_params, tile_b=1024):
    """x: [B, INPUT_SIZE] float32 -> [B, OUTPUT_SIZE] float32."""
    B = x.shape[0]
    w1_p, b1, w2_b, b2, w3_b, b3, w4_p, b4_p = prepared_params

    # ---- activation padding (only per-call data prep) ----
    x_p = jnp.pad(x, ((0, 0), (0, K_PAD - INPUT_SIZE)))

    # ---- batch tiling (keep tiles sublane-aligned and VMEM-friendly) ----
    tb = min(tile_b, _round_up(B, 8))
    b_pad = _round_up(B, tb)
    if b_pad != B:
        x_p = jnp.pad(x_p, ((0, b_pad - B), (0, 0)))
    grid = (b_pad // tb,)

    # ---- advisory cost estimate ----
    flops = 2 * b_pad * (K_PAD * HIDDEN_NODES
                         + 2 * HIDDEN_NODES * HIDDEN_NODES
                         + HIDDEN_NODES * N_PAD)
    transcendentals = 3 * b_pad * HIDDEN_NODES
    weight_bytes = (2 * (K_PAD * HIDDEN_NODES + 2 * HIDDEN_NODES * HIDDEN_NODES
                         + HIDDEN_NODES * N_PAD)
                    + 4 * (3 * HIDDEN_NODES + N_PAD))
    bytes_accessed = b_pad * (K_PAD + N_PAD) * 4 + weight_bytes

    out_p = pl.pallas_call(
        _pinn_mlp_kernel,
        out_shape=jax.ShapeDtypeStruct((b_pad, N_PAD), jnp.float32),
        grid=grid,
        in_specs=[
            pl.BlockSpec((tb, K_PAD), lambda i: (i, 0)),          # x tile
            _resident((K_PAD, HIDDEN_NODES)),                     # w1
            _resident((1, HIDDEN_NODES)),                         # b1
            _resident((HIDDEN_NODES, HIDDEN_NODES)),              # w2
            _resident((1, HIDDEN_NODES)),                         # b2
            _resident((HIDDEN_NODES, HIDDEN_NODES)),              # w3
            _resident((1, HIDDEN_NODES)),                         # b3
            _resident((HIDDEN_NODES, N_PAD)),                     # w4 (padded)
            _resident((1, N_PAD)),                                # b4 (padded)
        ],
        out_specs=pl.BlockSpec((tb, N_PAD), lambda i: (i, 0)),
        compiler_params=pltpu.CompilerParams(
            dimension_semantics=("parallel",)),
        cost_estimate=pl.CostEstimate(
            flops=flops,
            transcendentals=transcendentals,
            bytes_accessed=bytes_accessed),
    )(x_p, w1_p, b1, w2_b, b2, w3_b, b3, w4_p, b4_p)

    return out_p[:B, :OUTPUT_SIZE]


def init_params(key):
    """Deterministic init mimicking nn.Linear (uniform +-1/sqrt(fan_in)).

    Weights are stored [in, out] (transposed vs PyTorch) so the kernel
    computes x @ W + b.
    """
    dims = [(INPUT_SIZE, HIDDEN_NODES),
            (HIDDEN_NODES, HIDDEN_NODES),
            (HIDDEN_NODES, HIDDEN_NODES),
            (HIDDEN_NODES, OUTPUT_SIZE)]
    params = []
    for (fan_in, fan_out) in dims:
        key, kw, kb = jax.random.split(key, 3)
        bound = 1.0 / jnp.sqrt(float(fan_in))
        w = jax.random.uniform(kw, (fan_in, fan_out), jnp.float32, -bound, bound)
        b = jax.random.uniform(kb, (1, fan_out), jnp.float32, -bound, bound)
        params += [w, b]
    return tuple(params)


def pinn_forward_ref(x, params):
    """Pure-JAX f32 reference for correctness checking."""
    w1, b1, w2, b2, w3, b3, w4, b4 = params
    h = jnp.tanh(x @ w1 + b1)
    h = jnp.tanh(h @ w2 + b2)
    h = jnp.tanh(h @ w3 + b3)
    return h @ w4 + b4


if __name__ == "__main__":
    key = jax.random.PRNGKey(0)
    key, kx = jax.random.split(key)

    batch = 8
    x = jax.random.normal(kx, (batch, INPUT_SIZE), dtype=jnp.float32)

    params = init_params(key)
    prepared = prepare_params(params)

    out = pinn_forward(x, prepared)
    out = jax.block_until_ready(out)

    ref = pinn_forward_ref(x, params)
    assert out.shape == (batch, OUTPUT_SIZE)
    # bf16 MXU feed with f32 accumulation: relaxed tolerance vs f32 reference.
    assert jnp.allclose(out, ref, atol=3e-2, rtol=3e-2), "mismatch vs reference"

    print("KERNEL_OK")
</pallas_src>

<mosaic_0001>
module attributes {stable_mosaic.version = 11 : i64} {
  func.func @_pinn_mlp_kernel(%arg0: i32, %arg1: memref<8x8xf32, #tpu.memory_space<vmem>>, %arg2: memref<8x128xbf16, #tpu.memory_space<vmem>>, %arg3: memref<1x128xf32, #tpu.memory_space<vmem>>, %arg4: memref<128x128xbf16, #tpu.memory_space<vmem>>, %arg5: memref<1x128xf32, #tpu.memory_space<vmem>>, %arg6: memref<128x128xbf16, #tpu.memory_space<vmem>>, %arg7: memref<1x128xf32, #tpu.memory_space<vmem>>, %arg8: memref<128x128xbf16, #tpu.memory_space<vmem>>, %arg9: memref<1x128xf32, #tpu.memory_space<vmem>>, %arg10: memref<8x128xf32, #tpu.memory_space<vmem>>) attributes {dimension_semantics = [#tpu.dimension_semantics<parallel>], iteration_bounds = array<i64: 1>, scalar_prefetch = 0 : i64, scratch_operands = 0 : i64, tpu.core_type = #tpu.core_type<tc>, window_params = [{transform_indices = @transform_0, window_bounds = array<i64: 8, 8>}, {pipeline_mode = #tpu.pipeline_mode<synchronous>, transform_indices = @transform_1, window_bounds = array<i64: 8, 128>}, {pipeline_mode = #tpu.pipeline_mode<synchronous>, transform_indices = @transform_2, window_bounds = array<i64: 1, 128>}, {pipeline_mode = #tpu.pipeline_mode<synchronous>, transform_indices = @transform_3, window_bounds = array<i64: 128, 128>}, {pipeline_mode = #tpu.pipeline_mode<synchronous>, transform_indices = @transform_4, window_bounds = array<i64: 1, 128>}, {pipeline_mode = #tpu.pipeline_mode<synchronous>, transform_indices = @transform_5, window_bounds = array<i64: 128, 128>}, {pipeline_mode = #tpu.pipeline_mode<synchronous>, transform_indices = @transform_6, window_bounds = array<i64: 1, 128>}, {pipeline_mode = #tpu.pipeline_mode<synchronous>, transform_indices = @transform_7, window_bounds = array<i64: 128, 128>}, {pipeline_mode = #tpu.pipeline_mode<synchronous>, transform_indices = @transform_8, window_bounds = array<i64: 1, 128>}, {transform_indices = @transform_9, window_bounds = array<i64: 8, 128>}]} {
    %c0 = arith.constant 0 : index
    %c0_0 = arith.constant 0 : index
    %0 = vector.load %arg1[%c0, %c0_0] : memref<8x8xf32, #tpu.memory_space<vmem>>, vector<8x8xf32>
    %1 = arith.truncf %0 : vector<8x8xf32> to vector<8x8xbf16>
    %c0_1 = arith.constant 0 : index
    %c0_2 = arith.constant 0 : index
    %2 = vector.load %arg2[%c0_1, %c0_2] : memref<8x128xbf16, #tpu.memory_space<vmem>>, vector<8x128xbf16>
    %cst = arith.constant dense<0.000000e+00> : vector<8x128xf32>
    %3 = tpu.matmul %1, %2, %cst {dimension_numbers = #tpu.dot_dimension_numbers<[1], [0], [0], [1], [0, 0, 1, 1], [], []>} : vector<8x8xbf16>, vector<8x128xbf16>, vector<8x128xf32> -> vector<8x128xf32>
    %c0_3 = arith.constant 0 : index
    %c0_4 = arith.constant 0 : index
    %4 = vector.load %arg3[%c0_3, %c0_4] : memref<1x128xf32, #tpu.memory_space<vmem>>, vector<1x128xf32>
    %5 = vector.broadcast %4 : vector<1x128xf32> to vector<8x128xf32>
    %6 = arith.addf %3, %5 : vector<8x128xf32>
    %7 = math.tanh %6 : vector<8x128xf32>
    %8 = arith.truncf %7 : vector<8x128xf32> to vector<8x128xbf16>
    %c0_5 = arith.constant 0 : index
    %c0_6 = arith.constant 0 : index
    %9 = vector.load %arg4[%c0_5, %c0_6] : memref<128x128xbf16, #tpu.memory_space<vmem>>, vector<128x128xbf16>
    %cst_7 = arith.constant dense<0.000000e+00> : vector<8x128xf32>
    %10 = tpu.matmul %8, %9, %cst_7 {dimension_numbers = #tpu.dot_dimension_numbers<[1], [0], [0], [1], [0, 0, 1, 1], [], []>} : vector<8x128xbf16>, vector<128x128xbf16>, vector<8x128xf32> -> vector<8x128xf32>
    %c0_8 = arith.constant 0 : index
    %c0_9 = arith.constant 0 : index
    %11 = vector.load %arg5[%c0_8, %c0_9] : memref<1x128xf32, #tpu.memory_space<vmem>>, vector<1x128xf32>
    %12 = vector.broadcast %11 : vector<1x128xf32> to vector<8x128xf32>
    %13 = arith.addf %10, %12 : vector<8x128xf32>
    %14 = math.tanh %13 : vector<8x128xf32>
    %15 = arith.truncf %14 : vector<8x128xf32> to vector<8x128xbf16>
    %c0_10 = arith.constant 0 : index
    %c0_11 = arith.constant 0 : index
    %16 = vector.load %arg6[%c0_10, %c0_11] : memref<128x128xbf16, #tpu.memory_space<vmem>>, vector<128x128xbf16>
    %cst_12 = arith.constant dense<0.000000e+00> : vector<8x128xf32>
    %17 = tpu.matmul %15, %16, %cst_12 {dimension_numbers = #tpu.dot_dimension_numbers<[1], [0], [0], [1], [0, 0, 1, 1], [], []>} : vector<8x128xbf16>, vector<128x128xbf16>, vector<8x128xf32> -> vector<8x128xf32>
    %c0_13 = arith.constant 0 : index
    %c0_14 = arith.constant 0 : index
    %18 = vector.load %arg7[%c0_13, %c0_14] : memref<1x128xf32, #tpu.memory_space<vmem>>, vector<1x128xf32>
    %19 = vector.broadcast %18 : vector<1x128xf32> to vector<8x128xf32>
    %20 = arith.addf %17, %19 : vector<8x128xf32>
    %21 = math.tanh %20 : vector<8x128xf32>
    %22 = arith.truncf %21 : vector<8x128xf32> to vector<8x128xbf16>
    %c0_15 = arith.constant 0 : index
    %c0_16 = arith.constant 0 : index
    %23 = vector.load %arg8[%c0_15, %c0_16] : memref<128x128xbf16, #tpu.memory_space<vmem>>, vector<128x128xbf16>
    %cst_17 = arith.constant dense<0.000000e+00> : vector<8x128xf32>
    %24 = tpu.matmul %22, %23, %cst_17 {dimension_numbers = #tpu.dot_dimension_numbers<[1], [0], [0], [1], [0, 0, 1, 1], [], []>} : vector<8x128xbf16>, vector<128x128xbf16>, vector<8x128xf32> -> vector<8x128xf32>
    %c0_18 = arith.constant 0 : index
    %c0_19 = arith.constant 0 : index
    %25 = vector.load %arg9[%c0_18, %c0_19] : memref<1x128xf32, #tpu.memory_space<vmem>>, vector<1x128xf32>
    %26 = vector.broadcast %25 : vector<1x128xf32> to vector<8x128xf32>
    %27 = arith.addf %24, %26 : vector<8x128xf32>
    %c0_20 = arith.constant 0 : index
    %c0_21 = arith.constant 0 : index
    %28 = vector.load %arg10[%c0_20, %c0_21] : memref<8x128xf32, #tpu.memory_space<vmem>>, vector<8x128xf32>
    tpu.vector_store %arg10[%c0_20, %c0_21], %27 {strides = array<i32>} : memref<8x128xf32, #tpu.memory_space<vmem>>, vector<8x128xf32>,
    return
  }
  func.func @transform_0(%arg0: i32) -> (i32, i32) {
    %c0_i32 = arith.constant 0 : i32
    %c0_i32_0 = arith.constant 0 : i32
    return %arg0, %c0_i32 : i32, i32
  }
  func.func @transform_1(%arg0: i32) -> (i32, i32) {
    %c0_i32 = arith.constant 0 : i32
    %c0_i32_0 = arith.constant 0 : i32
    %c0_i32_1 = arith.constant 0 : i32
    return %c0_i32, %c0_i32_0 : i32, i32
  }
  func.func @transform_2(%arg0: i32) -> (i32, i32) {
    %c0_i32 = arith.constant 0 : i32
    %c0_i32_0 = arith.constant 0 : i32
    %c0_i32_1 = arith.constant 0 : i32
    return %c0_i32, %c0_i32_0 : i32, i32
  }
  func.func @transform_3(%arg0: i32) -> (i32, i32) {
    %c0_i32 = arith.constant 0 : i32
    %c0_i32_0 = arith.constant 0 : i32
    %c0_i32_1 = arith.constant 0 : i32
    return %c0_i32, %c0_i32_0 : i32, i32
  }
  func.func @transform_4(%arg0: i32) -> (i32, i32) {
    %c0_i32 = arith.constant 0 : i32
    %c0_i32_0 = arith.constant 0 : i32
    %c0_i32_1 = arith.constant 0 : i32
    return %c0_i32, %c0_i32_0 : i32, i32
  }
  func.func @transform_5(%arg0: i32) -> (i32, i32) {
    %c0_i32 = arith.constant 0 : i32
    %c0_i32_0 = arith.constant 0 : i32
    %c0_i32_1 = arith.constant 0 : i32
    return %c0_i32, %c0_i32_0 : i32, i32
  }
  func.func @transform_6(%arg0: i32) -> (i32, i32) {
    %c0_i32 = arith.constant 0 : i32
    %c0_i32_0 = arith.constant 0 : i32
    %c0_i32_1 = arith.constant 0 : i32
    return %c0_i32, %c0_i32_0 : i32, i32
  }
  func.func @transform_7(%arg0: i32) -> (i32, i32) {
    %c0_i32 = arith.constant 0 : i32
    %c0_i32_0 = arith.constant 0 : i32
    %c0_i32_1 = arith.constant 0 : i32
    return %c0_i32, %c0_i32_0 : i32, i32
  }
  func.func @transform_8(%arg0: i32) -> (i32, i32) {
    %c0_i32 = arith.constant 0 : i32
    %c0_i32_0 = arith.constant 0 : i32
    %c0_i32_1 = arith.constant 0 : i32
    return %c0_i32, %c0_i32_0 : i32, i32
  }
  func.func @transform_9(%arg0: i32) -> (i32, i32) {
    %c0_i32 = arith.constant 0 : i32
    %c0_i32_0 = arith.constant 0 : i32
    return %arg0, %c0_i32 : i32, i32
  }
}

</mosaic_0001>

<llo_original>
// kernel: pinn_forward.1
$region0: #{pinn_forward.1}
  #allocation0 [shape = 'u32[]', space=smem, size = 0x4, offset = 0x4, fixed_abs, tag = 'smem constant byte address 0x4 - core index']
  #allocation1 [shape = 'u32[144,128]{1,0:T(1,128)}', space=vmem, size = 0x12000, scoped, tag = 'internal scratch']
  %s0 = inlined_call_operand.vmem [shape: f32[8,8], index: 0, kind: input, shape index: {}]
  %s1 = inlined_call_operand.vmem [shape: bf16[8,128], index: 1, kind: input, shape index: {}]
  %s2 = inlined_call_operand.vmem [shape: f32[1,128], index: 2, kind: input, shape index: {}]
  %s3 = inlined_call_operand.hbm [shape: bf16[128,128], index: 3, kind: input, shape index: {}]
  %s4 = inlined_call_operand.vmem [shape: f32[1,128], index: 4, kind: input, shape index: {}]
  %s5 = inlined_call_operand.hbm [shape: bf16[128,128], index: 5, kind: input, shape index: {}]
  %s6 = inlined_call_operand.vmem [shape: f32[1,128], index: 6, kind: input, shape index: {}]
  %s7 = inlined_call_operand.hbm [shape: bf16[128,128], index: 7, kind: input, shape index: {}]
  %s8 = inlined_call_operand.vmem [shape: f32[1,128], index: 8, kind: input, shape index: {}]
  %s9 = inlined_call_operand.vmem [shape: f32[8,128], index: 9, kind: output, shape index: {}]
  %s10 = sld [smem:[#allocation0]]
  $region58: #{pinn_forward.1} parent=0
    _
  %s12 = ssub.s32 1, %s10
  %s13 = scalar_select 0, %s12, %s10
  $region1: #{pinn_forward.1} parent=0
    #allocation2 [shape = 'u8[32768]{0}', space=vmem, size = 0x8000, scoped, tag = 'input window, operand 3, single buffered']
    #allocation3 [shape = 's32[1]{0}', space=sflag, size = 0x4, scoped, tag = 'scoped memory for pinn_forward.1']
    #allocation4 [shape = 'u8[32768]{0}', space=vmem, size = 0x8000, scoped, tag = 'input window, operand 5, single buffered']
    #allocation5 [shape = 's32[1]{0}', space=sflag, size = 0x4, scoped, tag = 'scoped memory for pinn_forward.1']
    #allocation6 [shape = 'u8[32768]{0}', space=vmem, size = 0x8000, scoped, tag = 'input window, operand 7, single buffered']
    %14 = vsyncpa [#allocation3], 0
    %15 = vsyncpa [#allocation5], 0
    // Predicated region
    $region2: #{pinn_forward.1} parent=1 // pred_check
      _
    $region3: #{pinn_forward.1} parent=1 // pred_check_branch
      %17 = sbr.rel (0) target = $region5
    $region4: #{pinn_forward.1} parent=1 // pred_region
      _
    $region5: #{pinn_forward.1} parent=1 // pred_fallthru
      _
    // Predicated region
    $region6: #{pinn_forward.1} parent=1 // pred_check
      _
    $region7: #{pinn_forward.1} parent=1 // pred_check_branch
      %19 = sbr.rel (0) target = $region9
    $region8: #{pinn_forward.1} parent=1 // pred_region
      _
    $region9: #{pinn_forward.1} parent=1 // pred_fallthru
      _
    // Predicated region
    $region10: #{pinn_forward.1} parent=1 // pred_check
      _
    $region11: #{pinn_forward.1} parent=1 // pred_check_branch
      %21 = sbr.rel (0) target = $region13
    $region12: #{pinn_forward.1} parent=1 // pred_region
      _
    $region13: #{pinn_forward.1} parent=1 // pred_fallthru
      _
    // Predicated region
    $region14: #{pinn_forward.1} parent=1 // pred_check
      _
    $region15: #{pinn_forward.1} parent=1 // pred_check_branch
      %23 = sbr.rel (0) target = $region17
    $region16: #{pinn_forward.1} parent=1 // pred_region
      %s25 = ssub.s32 1024, 1024
      %26 = vsyncadd [#allocation3], %s25
      %s27 = sshll.u32 [#allocation2], 4
      %s28 = int_to_ptr.vmem [resolvable:$true] %s27
      %33 = dma.hbm_to_vmem [thread:$0]  %s3, 1024, %s28, [#allocation3], 64, 64, 4
    $region17: #{pinn_forward.1} parent=1 // pred_fallthru
      _
    // Predicated region
    $region18: #{pinn_forward.1} parent=1 // pred_check
      _
    $region19: #{pinn_forward.1} parent=1 // pred_check_branch
      %35 = sbr.rel (0) target = $region21
    $region20: #{pinn_forward.1} parent=1 // pred_region
      _
    $region21: #{pinn_forward.1} parent=1 // pred_fallthru
      _
    // Predicated region
    $region22: #{pinn_forward.1} parent=1 // pred_check
      _
    $region23: #{pinn_forward.1} parent=1 // pred_check_branch
      %37 = sbr.rel (0) target = $region25
    $region24: #{pinn_forward.1} parent=1 // pred_region
      %s39 = ssub.s32 1024, 1024
      %40 = vsyncadd [#allocation5], %s39
      %s41 = sshll.u32 [#allocation4], 4
      %s42 = int_to_ptr.vmem [resolvable:$true] %s41
      %47 = dma.hbm_to_vmem [thread:$0]  %s5, 1024, %s42, [#allocation5], 64, 64, 4
    $region25: #{pinn_forward.1} parent=1 // pred_fallthru
      _
    // Predicated region
    $region26: #{pinn_forward.1} parent=1 // pred_check
      _
    $region27: #{pinn_forward.1} parent=1 // pred_check_branch
      %49 = sbr.rel (0) target = $region29
    $region28: #{pinn_forward.1} parent=1 // pred_region
      _
    $region29: #{pinn_forward.1} parent=1 // pred_fallthru
      _
    // Predicated region
    $region30: #{pinn_forward.1} parent=1 // pred_check
      _
    $region31: #{pinn_forward.1} parent=1 // pred_check_branch
      %51 = sbr.rel (0) target = $region33
    $region32: #{pinn_forward.1} parent=1 // pred_region
      %s53 = ssub.s32 1024, 1024
      %54 = vsyncadd [#allocation5], %s53
      %s55 = sshll.u32 [#allocation6], 4
      %s56 = int_to_ptr.vmem [resolvable:$true] %s55
      %61 = dma.hbm_to_vmem [thread:$0]  %s7, 1024, %s56, [#allocation5], 64, 64, 4
    $region33: #{pinn_forward.1} parent=1 // pred_fallthru
      _
    // Predicated region
    $region34: #{pinn_forward.1} parent=1 // pred_check
      _
    $region35: #{pinn_forward.1} parent=1 // pred_check_branch
      %63 = sbr.rel (0) target = $region37
    $region36: #{pinn_forward.1} parent=1 // pred_region
      _
    $region37: #{pinn_forward.1} parent=1 // pred_fallthru
      _
    // Predicated region
    $region38: #{pinn_forward.1} parent=1 // pred_check
      _
    $region39: #{pinn_forward.1} parent=1 // pred_check_branch
      %65 = sbr.rel (0) target = $region41
    $region40: #{pinn_forward.1} parent=1 // pred_region
      %66 = dma.done [#allocation3], 1024
    $region41: #{pinn_forward.1} parent=1 // pred_fallthru
      _
    // Predicated region
    $region42: #{pinn_forward.1} parent=1 // pred_check
      _
    $region43: #{pinn_forward.1} parent=1 // pred_check_branch
      %68 = sbr.rel (0) target = $region45
    $region44: #{pinn_forward.1} parent=1 // pred_region
      %69 = dma.done [#allocation5], 1024
    $region45: #{pinn_forward.1} parent=1 // pred_fallthru
      _
    // Predicated region
    $region46: #{pinn_forward.1} parent=1 // pred_check
      _
    $region47: #{pinn_forward.1} parent=1 // pred_check_branch
      %71 = sbr.rel (0) target = $region49
    $region48: #{pinn_forward.1} parent=1 // pred_region
      %72 = dma.done [#allocation5], 1024
    $region49: #{pinn_forward.1} parent=1 // pred_fallthru
      _
    %v74 = vld [vmem:[%s0] sm:$0xff]
    %v75 = vpack.c.bf16 %v74, %v74
    %v76 = vld [vmem:[%s1] sm:$0xf]
    %v77 = vld [vmem:[%s2] sm:$0x1]
    %v79 = vlaneseq
    %v80 = vshrl.u32 %v79, 7
    %v81 = vsub.s32 0, %v80
    %v82 = vrot.slane %v77, %v81
    %vm84 = vcmask 64512
    %v86 = vsel %vm84, %v75, 0
    %vm88 = vcmask 1043456
    %v90 = vsel %vm88, %v76, 0
    %92 = vmatprep.subr.bf16.mxu0 0
    %93 = vmatpush1.bf16.msra.mxu0 0
    %94 = vmatprep.subr.bf16.mxu0 0
    %95 = vmatpush1.bf16.msra.mxu0 0
    %96 = vmatprep.subr.bf16.mxu0 0
    %97 = vmatpush1.bf16.msra.mxu0 0
    %98 = vmatprep.subr.bf16.mxu0 0
    %99 = vmatpush1.bf16.msra.mxu0 0
    %100 = vmatprep.subr.bf16.mxu0 0
    %101 = vmatpush1.bf16.msra.mxu0 0
    %102 = vmatprep.subr.bf16.mxu0 0
    %103 = vmatpush1.bf16.msra.mxu0 0
    %104 = vmatprep.subr.bf16.mxu0 0
    %105 = vmatpush1.bf16.msra.mxu0 0
    %106 = vmatprep.subr.bf16.mxu0 0
    %107 = vmatpush1.bf16.msra.mxu0 %v90
    %108 = vmatprep.subr.bf16.mxu0 0
    %109 = vmatpush2.bf16.msra.mxu0 0
    %110 = vmatprep.subr.bf16.mxu0 0
    %111 = vmatpush2.bf16.msra.mxu0 0
    %112 = vmatprep.subr.bf16.mxu0 0
    %113 = vmatpush2.bf16.msra.mxu0 0
    %114 = vmatprep.subr.bf16.mxu0 0
    %115 = vmatpush2.bf16.msra.mxu0 0
    %116 = vmatprep.subr.bf16.mxu0 0
    %117 = vmatpush2.bf16.msra.mxu0 0
    %118 = vmatprep.subr.bf16.mxu0 0
    %119 = vmatpush2.bf16.msra.mxu0 0
    %120 = vmatprep.subr.bf16.mxu0 0
    %121 = vmatpush2.bf16.msra.mxu0 0
    %122 = vmatprep.subr.bf16.mxu0 0
    %123 = vmatpush2.bf16.msra.mxu0 0
    %124 = vmatprep.mubr.bf16.mxu0 0
    %125 = vmatmul.mubr.bf16.gmra.mxu0 %v86
    %v126 = vpop.f32.mrf.mxu0
    %v127 = vadd.f32 %v82, %v126
    %v128 = vpop.f32.mrf.mxu0
    %v129 = vpop.f32.mrf.mxu0
    %v130 = vpop.f32.mrf.mxu0
    %131 = vdwg.mxu0
    %v132 = vtanh.pop %v127
    %v133 = vpack.c.bf16 %v132, %v132
    %v134 = vld [vmem:[#allocation2] sm:$0xf]
    %v135 = vld [vmem:[#allocation2 + $0x4] sm:$0xf]
    %v136 = vld [vmem:[#allocation2 + $0x8] sm:$0xf]
    %v137 = vld [vmem:[#allocation2 + $0xc] sm:$0xf]
    %v138 = vld [vmem:[#allocation2 + $0x10] sm:$0xf]
    %v139 = vld [vmem:[#allocation2 + $0x14] sm:$0xf]
    %v140 = vld [vmem:[#allocation2 + $0x18] sm:$0xf]
    %v141 = vld [vmem:[#allocation2 + $0x1c] sm:$0xf]
    %v142 = vld [vmem:[#allocation2 + $0x20] sm:$0xf]
    %v143 = vld [vmem:[#allocation2 + $0x24] sm:$0xf]
    %v144 = vld [vmem:[#allocation2 + $0x28] sm:$0xf]
    %v145 = vld [vmem:[#allocation2 + $0x2c] sm:$0xf]
    %v146 = vld [vmem:[#allocation2 + $0x30] sm:$0xf]
    %v147 = vld [vmem:[#allocation2 + $0x34] sm:$0xf]
    %v148 = vld [vmem:[#allocation2 + $0x38] sm:$0xf]
    %v149 = vld [vmem:[#allocation2 + $0x3c] sm:$0xf]
    %v150 = vld [vmem:[%s4] sm:$0x1]
    %v152 = vlaneseq
    %v153 = vshrl.u32 %v152, 7
    %v154 = vsub.s32 0, %v153
    %v155 = vrot.slane %v150, %v154
    %v173 = vunpack.c.l.b16 %v134
    %v174 = vunpack.c.l.b16 %v135
    %v175 = vunpack.c.l.b16 %v136
    %v176 = vunpack.c.l.b16 %v137
    %v177 = vunpack.c.l.b16 %v138
    %v178 = vunpack.c.l.b16 %v139
    %v179 = vunpack.c.l.b16 %v140
    %v180 = vunpack.c.l.b16 %v141
    %v181 = vunpack.c.l.b16 %v142
    %v182 = vunpack.c.l.b16 %v143
    %v183 = vunpack.c.l.b16 %v144
    %v184 = vunpack.c.l.b16 %v145
    %v185 = vunpack.c.l.b16 %v146
    %v186 = vunpack.c.l.b16 %v147
    %v187 = vunpack.c.l.b16 %v148
    %v188 = vunpack.c.l.b16 %v149
    %v189 = vpack.c.b16 %v174, %v173
    %v190 = vpack.c.b16 %v176, %v175
    %v191 = vpack.c.b16 %v178, %v177
    %v192 = vpack.c.b16 %v180, %v179
    %v193 = vpack.c.b16 %v182, %v181
    %v194 = vpack.c.b16 %v184, %v183
    %v195 = vpack.c.b16 %v186, %v185
    %v196 = vpack.c.b16 %v188, %v187
    %205 = vmatprep.subr.bf16.mxu0 0
    %206 = vmatpush1.bf16.msra.mxu0 %v196
    %207 = vmatprep.subr.bf16.mxu0 0
    %208 = vmatpush1.bf16.msra.mxu0 %v195
    %209 = vmatprep.subr.bf16.mxu0 0
    %210 = vmatpush1.bf16.msra.mxu0 %v194
    %211 = vmatprep.subr.bf16.mxu0 0
    %212 = vmatpush1.bf16.msra.mxu0 %v193
    %213 = vmatprep.subr.bf16.mxu0 0
    %214 = vmatpush1.bf16.msra.mxu0 %v192
    %215 = vmatprep.subr.bf16.mxu0 0
    %216 = vmatpush1.bf16.msra.mxu0 %v191
    %217 = vmatprep.subr.bf16.mxu0 0
    %218 = vmatpush1.bf16.msra.mxu0 %v190
    %219 = vmatprep.subr.bf16.mxu0 0
    %220 = vmatpush1.bf16.msra.mxu0 %v189
    %221 = vmatprep.subr.bf16.mxu0 0
    %222 = vmatpush2.bf16.msra.mxu0 0
    %223 = vmatprep.subr.bf16.mxu0 0
    %224 = vmatpush2.bf16.msra.mxu0 0
    %225 = vmatprep.subr.bf16.mxu0 0
    %226 = vmatpush2.bf16.msra.mxu0 0
    %227 = vmatprep.subr.bf16.mxu0 0
    %228 = vmatpush2.bf16.msra.mxu0 0
    %229 = vmatprep.subr.bf16.mxu0 0
    %230 = vmatpush2.bf16.msra.mxu0 0
    %231 = vmatprep.subr.bf16.mxu0 0
    %232 = vmatpush2.bf16.msra.mxu0 0
    %233 = vmatprep.subr.bf16.mxu0 0
    %234 = vmatpush2.bf16.msra.mxu0 0
    %235 = vmatprep.subr.bf16.mxu0 0
    %236 = vmatpush2.bf16.msra.mxu0 0
    %237 = vmatprep.mubr.bf16.mxu0 0
    %238 = vmatmul.mubr.bf16.gmra.mxu0 %v133
    %v239 = vpop.f32.mrf.mxu0
    %v240 = vadd.f32 %v155, %v239
    %v241 = vpop.f32.mrf.mxu0
    %v242 = vpop.f32.mrf.mxu0
    %v243 = vpop.f32.mrf.mxu0
    %244 = vdwg.mxu0
    %v245 = vtanh.pop %v240
    %v246 = vpack.c.bf16 %v245, %v245
    %v247 = vld [vmem:[#allocation4] sm:$0xf]
    %v248 = vld [vmem:[#allocation4 + $0x4] sm:$0xf]
    %v249 = vld [vmem:[#allocation4 + $0x8] sm:$0xf]
    %v250 = vld [vmem:[#allocation4 + $0xc] sm:$0xf]
    %v251 = vld [vmem:[#allocation4 + $0x10] sm:$0xf]
    %v252 = vld [vmem:[#allocation4 + $0x14] sm:$0xf]
    %v253 = vld [vmem:[#allocation4 + $0x18] sm:$0xf]
    %v254 = vld [vmem:[#allocation4 + $0x1c] sm:$0xf]
    %v255 = vld [vmem:[#allocation4 + $0x20] sm:$0xf]
    %v256 = vld [vmem:[#allocation4 + $0x24] sm:$0xf]
    %v257 = vld [vmem:[#allocation4 + $0x28] sm:$0xf]
    %v258 = vld [vmem:[#allocation4 + $0x2c] sm:$0xf]
    %v259 = vld [vmem:[#allocation4 + $0x30] sm:$0xf]
    %v260 = vld [vmem:[#allocation4 + $0x34] sm:$0xf]
    %v261 = vld [vmem:[#allocation4 + $0x38] sm:$0xf]
    %v262 = vld [vmem:[#allocation4 + $0x3c] sm:$0xf]
    %v263 = vld [vmem:[%s6] sm:$0x1]
    %v265 = vlaneseq
    %v266 = vshrl.u32 %v265, 7
    %v267 = vsub.s32 0, %v266
    %v268 = vrot.slane %v263, %v267
    %v286 = vunpack.c.l.b16 %v247
    %v287 = vunpack.c.l.b16 %v248
    %v288 = vunpack.c.l.b16 %v249
    %v289 = vunpack.c.l.b16 %v250
    %v290 = vunpack.c.l.b16 %v251
    %v291 = vunpack.c.l.b16 %v252
    %v292 = vunpack.c.l.b16 %v253
    %v293 = vunpack.c.l.b16 %v254
    %v294 = vunpack.c.l.b16 %v255
    %v295 = vunpack.c.l.b16 %v256
    %v296 = vunpack.c.l.b16 %v257
    %v297 = vunpack.c.l.b16 %v258
    %v298 = vunpack.c.l.b16 %v259
    %v299 = vunpack.c.l.b16 %v260
    %v300 = vunpack.c.l.b16 %v261
    %v301 = vunpack.c.l.b16 %v262
    %v302 = vpack.c.b16 %v287, %v286
    %v303 = vpack.c.b16 %v289, %v288
    %v304 = vpack.c.b16 %v291, %v290
    %v305 = vpack.c.b16 %v293, %v292
    %v306 = vpack.c.b16 %v295, %v294
    %v307 = vpack.c.b16 %v297, %v296
    %v308 = vpack.c.b16 %v299, %v298
    %v309 = vpack.c.b16 %v301, %v300
    %318 = vmatprep.subr.bf16.mxu0 0
    %319 = vmatpush1.bf16.msra.mxu0 %v309
    %320 = vmatprep.subr.bf16.mxu0 0
    %321 = vmatpush1.bf16.msra.mxu0 %v308
    %322 = vmatprep.subr.bf16.mxu0 0
    %323 = vmatpush1.bf16.msra.mxu0 %v307
    %324 = vmatprep.subr.bf16.mxu0 0
    %325 = vmatpush1.bf16.msra.mxu0 %v306
    %326 = vmatprep.subr.bf16.mxu0 0
    %327 = vmatpush1.bf16.msra.mxu0 %v305
    %328 = vmatprep.subr.bf16.mxu0 0
    %329 = vmatpush1.bf16.msra.mxu0 %v304
    %330 = vmatprep.subr.bf16.mxu0 0
    %331 = vmatpush1.bf16.msra.mxu0 %v303
    %332 = vmatprep.subr.bf16.mxu0 0
    %333 = vmatpush1.bf16.msra.mxu0 %v302
    %334 = vmatprep.subr.bf16.mxu0 0
    %335 = vmatpush2.bf16.msra.mxu0 0
    %336 = vmatprep.subr.bf16.mxu0 0
    %337 = vmatpush2.bf16.msra.mxu0 0
    %338 = vmatprep.subr.bf16.mxu0 0
    %339 = vmatpush2.bf16.msra.mxu0 0
    %340 = vmatprep.subr.bf16.mxu0 0
    %341 = vmatpush2.bf16.msra.mxu0 0
    %342 = vmatprep.subr.bf16.mxu0 0
    %343 = vmatpush2.bf16.msra.mxu0 0
    %344 = vmatprep.subr.bf16.mxu0 0
    %345 = vmatpush2.bf16.msra.mxu0 0
    %346 = vmatprep.subr.bf16.mxu0 0
    %347 = vmatpush2.bf16.msra.mxu0 0
    %348 = vmatprep.subr.bf16.mxu0 0
    %349 = vmatpush2.bf16.msra.mxu0 0
    %350 = vmatprep.mubr.bf16.mxu0 0
    %351 = vmatmul.mubr.bf16.gmra.mxu0 %v246
    %v352 = vpop.f32.mrf.mxu0
    %v353 = vadd.f32 %v268, %v352
    %v354 = vpop.f32.mrf.mxu0
    %v355 = vpop.f32.mrf.mxu0
    %v356 = vpop.f32.mrf.mxu0
    %357 = vdwg.mxu0
    %v358 = vtanh.pop %v353
    %v359 = vpack.c.bf16 %v358, %v358
    %v360 = vld [vmem:[#allocation6] sm:$0xf]
    %v361 = vld [vmem:[#allocation6 + $0x4] sm:$0xf]
    %v362 = vld [vmem:[#allocation6 + $0x8] sm:$0xf]
    %v363 = vld [vmem:[#allocation6 + $0xc] sm:$0xf]
    %v364 = vld [vmem:[#allocation6 + $0x10] sm:$0xf]
    %v365 = vld [vmem:[#allocation6 + $0x14] sm:$0xf]
    %v366 = vld [vmem:[#allocation6 + $0x18] sm:$0xf]
    %v367 = vld [vmem:[#allocation6 + $0x1c] sm:$0xf]
    %v368 = vld [vmem:[#allocation6 + $0x20] sm:$0xf]
    %v369 = vld [vmem:[#allocation6 + $0x24] sm:$0xf]
    %v370 = vld [vmem:[#allocation6 + $0x28] sm:$0xf]
    %v371 = vld [vmem:[#allocation6 + $0x2c] sm:$0xf]
    %v372 = vld [vmem:[#allocation6 + $0x30] sm:$0xf]
    %v373 = vld [vmem:[#allocation6 + $0x34] sm:$0xf]
    %v374 = vld [vmem:[#allocation6 + $0x38] sm:$0xf]
    %v375 = vld [vmem:[#allocation6 + $0x3c] sm:$0xf]
    %v376 = vld [vmem:[%s8] sm:$0x1]
    %v378 = vlaneseq
    %v379 = vshrl.u32 %v378, 7
    %v380 = vsub.s32 0, %v379
    %v381 = vrot.slane %v376, %v380
    %v399 = vunpack.c.l.b16 %v360
    %v400 = vunpack.c.l.b16 %v361
    %v401 = vunpack.c.l.b16 %v362
    %v402 = vunpack.c.l.b16 %v363
    %v403 = vunpack.c.l.b16 %v364
    %v404 = vunpack.c.l.b16 %v365
    %v405 = vunpack.c.l.b16 %v366
    %v406 = vunpack.c.l.b16 %v367
    %v407 = vunpack.c.l.b16 %v368
    %v408 = vunpack.c.l.b16 %v369
    %v409 = vunpack.c.l.b16 %v370
    %v410 = vunpack.c.l.b16 %v371
    %v411 = vunpack.c.l.b16 %v372
    %v412 = vunpack.c.l.b16 %v373
    %v413 = vunpack.c.l.b16 %v374
    %v414 = vunpack.c.l.b16 %v375
    %v415 = vpack.c.b16 %v400, %v399
    %v416 = vpack.c.b16 %v402, %v401
    %v417 = vpack.c.b16 %v404, %v403
    %v418 = vpack.c.b16 %v406, %v405
    %v419 = vpack.c.b16 %v408, %v407
    %v420 = vpack.c.b16 %v410, %v409
    %v421 = vpack.c.b16 %v412, %v411
    %v422 = vpack.c.b16 %v414, %v413
    %431 = vmatprep.subr.bf16.mxu0 0
    %432 = vmatpush1.bf16.msra.mxu0 %v422
    %433 = vmatprep.subr.bf16.mxu0 0
    %434 = vmatpush1.bf16.msra.mxu0 %v421
    %435 = vmatprep.subr.bf16.mxu0 0
    %436 = vmatpush1.bf16.msra.mxu0 %v420
    %437 = vmatprep.subr.bf16.mxu0 0
    %438 = vmatpush1.bf16.msra.mxu0 %v419
    %439 = vmatprep.subr.bf16.mxu0 0
    %440 = vmatpush1.bf16.msra.mxu0 %v418
    %441 = vmatprep.subr.bf16.mxu0 0
    %442 = vmatpush1.bf16.msra.mxu0 %v417
    %443 = vmatprep.subr.bf16.mxu0 0
    %444 = vmatpush1.bf16.msra.mxu0 %v416
    %445 = vmatprep.subr.bf16.mxu0 0
    %446 = vmatpush1.bf16.msra.mxu0 %v415
    %447 = vmatprep.subr.bf16.mxu0 0
    %448 = vmatpush2.bf16.msra.mxu0 0
    %449 = vmatprep.subr.bf16.mxu0 0
    %450 = vmatpush2.bf16.msra.mxu0 0
    %451 = vmatprep.subr.bf16.mxu0 0
    %452 = vmatpush2.bf16.msra.mxu0 0
    %453 = vmatprep.subr.bf16.mxu0 0
    %454 = vmatpush2.bf16.msra.mxu0 0
    %455 = vmatprep.subr.bf16.mxu0 0
    %456 = vmatpush2.bf16.msra.mxu0 0
    %457 = vmatprep.subr.bf16.mxu0 0
    %458 = vmatpush2.bf16.msra.mxu0 0
    %459 = vmatprep.subr.bf16.mxu0 0
    %460 = vmatpush2.bf16.msra.mxu0 0
    %461 = vmatprep.subr.bf16.mxu0 0
    %462 = vmatpush2.bf16.msra.mxu0 0
    %463 = vmatprep.mubr.bf16.mxu0 0
    %464 = vmatmul.mubr.bf16.gmra.mxu0 %v359
    %v465 = vpop.f32.mrf.mxu0
    %v466 = vadd.f32 %v381, %v465
    %v467 = vpop.f32.mrf.mxu0
    %v468 = vpop.f32.mrf.mxu0
    %v469 = vpop.f32.mrf.mxu0
    %470 = vdwg.mxu0
    %471 = vst [vmem:[%s9] sm:$0xff] %v466
    // Predicated region
    $region50: #{pinn_forward.1} parent=1 // pred_check
      _
    $region51: #{pinn_forward.1} parent=1 // pred_check_branch
      %473 = sbr.rel (0) target = $region53
    $region52: #{pinn_forward.1} parent=1 // pred_region
      _
    $region53: #{pinn_forward.1} parent=1 // pred_fallthru
      _
    // Predicated region
    $region54: #{pinn_forward.1} parent=1 // pred_check
      _
    $region55: #{pinn_forward.1} parent=1 // pred_check_branch
      %475 = sbr.rel (0) target = $region57
    $region56: #{pinn_forward.1} parent=1 // pred_region
      _
    $region57: #{pinn_forward.1} parent=1 // pred_fallthru
      _
    %476 = vsyncpa [#allocation3], 1
    %477 = vsyncpa [#allocation5], 1

</llo_original>
